<compile_context>
chip_gen: v7x
topology: tpu7x:2x2x1
jax: 0.10.0
libtpu: 0.0.40
codegen_flags: <defaults>
</compile_context>

<pallas_src>
import jax
import jax.numpy as jnp
from jax import lax
from jax.experimental import pallas as pl
from jax.experimental.pallas import tpu as pltpu


def char_rnn_kernel(ids_ref, emb_ref, wih_ref, whh_ref, wdec_ref,
                    b_ref, bdec_ref, h0_ref,                 # inputs
                    logits_ref, hT_ref,                      # outputs
                    hs_ref):                                 # VMEM scratch
    """Fused CharRNN forward: gather + input projection + tanh recurrence + decoder.

    ids_ref:    (S*B, 1) int32  time-major flattened token ids (row = t*B + b)
    emb_ref:    (V, H)           embedding table            (param_dtype)
    wih_ref:    (H, H)           W_ih^T                     (param_dtype)
    whh_ref:    (H, H)           W_hh^T                     (param_dtype)
    wdec_ref:   (H, O)           W_dec^T                    (param_dtype)
    b_ref:      (1, H)  f32      b_ih + b_hh
    bdec_ref:   (1, O)  f32      decoder bias
    h0_ref:     (B, H)  f32      initial hidden state
    logits_ref: (S*B, O) f32     time-major logits                      [output]
    hT_ref:     (B, H)  f32      final hidden state                     [output]
    hs_ref:     (S*B, H) f32     projected inputs, overwritten in place
                                 with hidden states                     [scratch]
    """
    SB, H = hs_ref.shape
    B = h0_ref.shape[0]
    V = emb_ref.shape[0]
    S = SB // B
    cdt = emb_ref.dtype                                     # matmul operand dtype

    # (1) Fused embedding gather + input projection, bias folded in:
    #     xp[t*B+b] = emb[ids[t,b]] @ W_ih^T + (b_ih + b_hh)
    #     done as onehot @ (emb @ W_ih^T): row selection via one-hot is exact.
    ew = jnp.dot(emb_ref[...], wih_ref[...],
                 preferred_element_type=jnp.float32).astype(cdt)        # (V, H)
    ids = ids_ref[...]                                                  # (S*B, 1)
    onehot = (ids == lax.broadcasted_iota(jnp.int32, (SB, V), 1)).astype(cdt)
    hs_ref[...] = (
        jnp.dot(onehot, ew, preferred_element_type=jnp.float32) + b_ref[...]
    )

    # (2) Serial recurrence: per step only a (B,H) @ (H,H) matmul + tanh.
    #     xp rows are overwritten in place with the hidden states (no extra buffer).
    whh = whh_ref[...]                                      # hoisted VMEM read
    def step(t, h_prev):
        row = pl.multiple_of(t * B, B)
        x_t = hs_ref[pl.ds(row, B), :]                      # (B, H) f32
        h = jnp.tanh(
            x_t + jnp.dot(h_prev.astype(cdt), whh,
                          preferred_element_type=jnp.float32)
        )
        hs_ref[pl.ds(row, B), :] = h                        # in-place overwrite
        return h

    h_last = lax.fori_loop(0, S, step, h0_ref[...], unroll=min(S, 8))
    hT_ref[...] = h_last

    # (3) Fused decoder: one lane-contiguous (S*B, H) @ (H, O) matmul over all (t, b).
    logits_ref[...] = (
        jnp.dot(hs_ref[...].astype(cdt), wdec_ref[...],
                preferred_element_type=jnp.float32)
        + bdec_ref[...]
    )


def char_rnn_forward(input_ids, hidden, params, *, param_dtype=jnp.float32):
    """Pallas-backed forward pass matching PyTorch CharRNN.forward.

    input_ids: (B, S) int32 token indices
    hidden:    (n_layers=1, B, H) float32
    returns:   (output (B, S, O), hidden (1, B, H))
    """
    emb = params["emb"].astype(param_dtype)                 # (V, H)
    wih_t = params["w_ih"].T.astype(param_dtype)            # (H, H)
    whh_t = params["w_hh"].T.astype(param_dtype)            # (H, H)
    wdec_t = params["w_dec"].T.astype(param_dtype)          # (H, O)
    b = (params["b_ih"] + params["b_hh"]).reshape(1, -1).astype(jnp.float32)
    bdec = params["b_dec"].reshape(1, -1).astype(jnp.float32)

    B, S = input_ids.shape
    V, H = emb.shape
    O = wdec_t.shape[1]
    h0 = hidden[0].astype(jnp.float32)                      # (B, H)

    # Only the tiny (B,S) int32 index array is transposed; all f32 activations stay
    # inside the kernel.
    ids_tm = input_ids.T.reshape(S * B, 1).astype(jnp.int32)

    logits, hT = pl.pallas_call(
        char_rnn_kernel,
        out_shape=(
            jax.ShapeDtypeStruct((S * B, O), jnp.float32),  # time-major logits
            jax.ShapeDtypeStruct((B, H), jnp.float32),      # final hidden
        ),
        grid_spec=pltpu.PrefetchScalarGridSpec(
            num_scalar_prefetch=0,
            grid=(1,),                                      # single invocation
            in_specs=[
                pl.BlockSpec((S * B, 1), lambda i: (0, 0)),  # ids (time-major)
                pl.BlockSpec((V, H), lambda i: (0, 0)),      # embedding table
                pl.BlockSpec((H, H), lambda i: (0, 0)),      # W_ih^T
                pl.BlockSpec((H, H), lambda i: (0, 0)),      # W_hh^T
                pl.BlockSpec((H, O), lambda i: (0, 0)),      # W_dec^T
                pl.BlockSpec((1, H), lambda i: (0, 0)),      # b_ih + b_hh
                pl.BlockSpec((1, O), lambda i: (0, 0)),      # b_dec
                pl.BlockSpec((B, H), lambda i: (0, 0)),      # h0
            ],
            out_specs=[
                pl.BlockSpec((S * B, O), lambda i: (0, 0)),  # logits (lane-dense 2D)
                pl.BlockSpec((B, H), lambda i: (0, 0)),      # final hidden
            ],
            scratch_shapes=[pltpu.VMEM((S * B, H), jnp.float32)],
        ),
        compiler_params=pltpu.CompilerParams(
            dimension_semantics=("arbitrary",),
        ),
    )(ids_tm, emb, wih_t, whh_t, wdec_t, b, bdec, h0)

    # Cheap reorder of the small logits tensor: time-major (S*B,O) -> batch_first.
    output = logits.reshape(S, B, O).transpose(1, 0, 2)     # (B, S, O)
    return output, hT[None, :, :]                           # (1, B, H)


def reference_forward(input_ids, hidden, params):
    """Pure-JAX reference mirroring the PyTorch f32 semantics."""
    def mm(a, c):
        return jnp.dot(a, c, precision=lax.Precision.HIGHEST)

    emb = params["emb"]
    x = jnp.take(emb, input_ids, axis=0)                    # (B, S, H)
    h = hidden[0]
    wih_t, whh_t = params["w_ih"].T, params["w_hh"].T
    b = params["b_ih"] + params["b_hh"]
    outs = []
    for t in range(x.shape[1]):
        h = jnp.tanh(mm(x[:, t], wih_t) + mm(h, whh_t) + b)
        outs.append(h)
    hs = jnp.stack(outs, axis=1)                            # (B, S, H)
    out = mm(hs, params["w_dec"].T) + params["b_dec"]       # (B, S, O)
    return out, h[None]


def init_params(key, input_size, hidden_size, output_size):
    ks = jax.random.split(key, 7)
    s = 0.1
    return {
        "emb":   jax.random.normal(ks[0], (input_size, hidden_size), jnp.float32) * s,
        "w_ih":  jax.random.normal(ks[1], (hidden_size, hidden_size), jnp.float32) * s,
        "w_hh":  jax.random.normal(ks[2], (hidden_size, hidden_size), jnp.float32) * s,
        "b_ih":  jax.random.normal(ks[3], (hidden_size,), jnp.float32) * s,
        "b_hh":  jax.random.normal(ks[4], (hidden_size,), jnp.float32) * s,
        "w_dec": jax.random.normal(ks[5], (output_size, hidden_size), jnp.float32) * s,
        "b_dec": jax.random.normal(ks[6], (output_size,), jnp.float32) * s,
    }


if __name__ == "__main__":
    input_size = 16    # vocab
    hidden_size = 32
    output_size = 16
    n_layers = 1
    batch, seq = 2, 8

    key = jax.random.PRNGKey(0)
    kp, kx = jax.random.split(key)
    params = init_params(kp, input_size, hidden_size, output_size)

    input_ids = jax.random.randint(kx, (batch, seq), 0, input_size, dtype=jnp.int32)
    hidden0 = jnp.zeros((n_layers, batch, hidden_size), jnp.float32)  # init_hidden

    ref_out, ref_hT = reference_forward(input_ids, hidden0, params)

    # f32 path: strict parity with the PyTorch f32 module.
    out, hT = char_rnn_forward(input_ids, hidden0, params, param_dtype=jnp.float32)
    out = jax.block_until_ready(out)
    hT = jax.block_until_ready(hT)
    assert out.shape == (batch, seq, output_size)
    assert hT.shape == (n_layers, batch, hidden_size)
    assert jnp.allclose(out, ref_out, atol=2e-5, rtol=1e-4)
    assert jnp.allclose(hT, ref_hT, atol=2e-5, rtol=1e-4)

    # bf16-operand path (MXU-native on v5e/v6e/v7x), f32 accumulation + f32 carried h.
    out_bf, hT_bf = char_rnn_forward(input_ids, hidden0, params,
                                     param_dtype=jnp.bfloat16)
    out_bf = jax.block_until_ready(out_bf)
    hT_bf = jax.block_until_ready(hT_bf)
    assert jnp.allclose(out_bf, ref_out, atol=5e-2, rtol=5e-2)
    assert jnp.allclose(hT_bf, ref_hT, atol=5e-2, rtol=5e-2)

    print("KERNEL_OK")
</pallas_src>

<mosaic_0001>
module attributes {stable_mosaic.version = 11 : i64} {
  func.func @char_rnn_kernel(%arg0: i32, %arg1: memref<16x1xi32, #tpu.memory_space<vmem>>, %arg2: memref<16x32xf32, #tpu.memory_space<vmem>>, %arg3: memref<32x32xf32, #tpu.memory_space<vmem>>, %arg4: memref<32x32xf32, #tpu.memory_space<vmem>>, %arg5: memref<32x16xf32, #tpu.memory_space<vmem>>, %arg6: memref<1x32xf32, #tpu.memory_space<vmem>>, %arg7: memref<1x16xf32, #tpu.memory_space<vmem>>, %arg8: memref<2x32xf32, #tpu.memory_space<vmem>>, %arg9: memref<16x16xf32, #tpu.memory_space<vmem>>, %arg10: memref<2x32xf32, #tpu.memory_space<vmem>>, %arg11: memref<16x32xf32, #tpu.memory_space<vmem>>) attributes {dimension_semantics = [#tpu.dimension_semantics<arbitrary>], iteration_bounds = array<i64: 1>, scalar_prefetch = 0 : i64, scratch_operands = 1 : i64, tpu.core_type = #tpu.core_type<tc>, window_params = [{pipeline_mode = #tpu.pipeline_mode<synchronous>, transform_indices = @transform_0, window_bounds = array<i64: 16, 1>}, {pipeline_mode = #tpu.pipeline_mode<synchronous>, transform_indices = @transform_1, window_bounds = array<i64: 16, 32>}, {pipeline_mode = #tpu.pipeline_mode<synchronous>, transform_indices = @transform_2, window_bounds = array<i64: 32, 32>}, {pipeline_mode = #tpu.pipeline_mode<synchronous>, transform_indices = @transform_3, window_bounds = array<i64: 32, 32>}, {pipeline_mode = #tpu.pipeline_mode<synchronous>, transform_indices = @transform_4, window_bounds = array<i64: 32, 16>}, {pipeline_mode = #tpu.pipeline_mode<synchronous>, transform_indices = @transform_5, window_bounds = array<i64: 1, 32>}, {pipeline_mode = #tpu.pipeline_mode<synchronous>, transform_indices = @transform_6, window_bounds = array<i64: 1, 16>}, {pipeline_mode = #tpu.pipeline_mode<synchronous>, transform_indices = @transform_7, window_bounds = array<i64: 2, 32>}, {pipeline_mode = #tpu.pipeline_mode<synchronous>, transform_indices = @transform_8, window_bounds = array<i64: 16, 16>}, {pipeline_mode = #tpu.pipeline_mode<synchronous>, transform_indices = @transform_9, window_bounds = array<i64: 2, 32>}]} {
    %c0 = arith.constant 0 : index
    %c0_0 = arith.constant 0 : index
    %0 = vector.load %arg2[%c0, %c0_0] : memref<16x32xf32, #tpu.memory_space<vmem>>, vector<16x32xf32>
    %c0_1 = arith.constant 0 : index
    %c0_2 = arith.constant 0 : index
    %1 = vector.load %arg3[%c0_1, %c0_2] : memref<32x32xf32, #tpu.memory_space<vmem>>, vector<32x32xf32>
    %cst = arith.constant dense<0.000000e+00> : vector<16x32xf32>
    %2 = tpu.matmul %0, %1, %cst {dimension_numbers = #tpu.dot_dimension_numbers<[1], [0], [0], [1], [0, 0, 1, 1], [], []>} : vector<16x32xf32>, vector<32x32xf32>, vector<16x32xf32> -> vector<16x32xf32>
    %c0_3 = arith.constant 0 : index
    %c0_4 = arith.constant 0 : index
    %3 = vector.load %arg1[%c0_3, %c0_4] : memref<16x1xi32, #tpu.memory_space<vmem>>, vector<16x1xi32>
    %4 = tpu.iota {dimensions = array<i32: 1>} : vector<16x16xi32>
    %5 = vector.broadcast %3 : vector<16x1xi32> to vector<16x16xi32>
    %6 = arith.cmpi eq, %5, %4 : vector<16x16xi32>
    %7 = arith.extui %6 : vector<16x16xi1> to vector<16x16xi32>
    %8 = arith.sitofp %7 : vector<16x16xi32> to vector<16x16xf32>
    %cst_5 = arith.constant dense<0.000000e+00> : vector<16x32xf32>
    %9 = tpu.matmul %8, %2, %cst_5 {dimension_numbers = #tpu.dot_dimension_numbers<[1], [0], [0], [1], [0, 0, 1, 1], [], []>} : vector<16x16xf32>, vector<16x32xf32>, vector<16x32xf32> -> vector<16x32xf32>
    %c0_6 = arith.constant 0 : index
    %c0_7 = arith.constant 0 : index
    %10 = vector.load %arg6[%c0_6, %c0_7] : memref<1x32xf32, #tpu.memory_space<vmem>>, vector<1x32xf32>
    %11 = vector.broadcast %10 : vector<1x32xf32> to vector<16x32xf32>
    %12 = arith.addf %9, %11 : vector<16x32xf32>
    %c0_8 = arith.constant 0 : index
    %c0_9 = arith.constant 0 : index
    %13 = vector.load %arg11[%c0_8, %c0_9] : memref<16x32xf32, #tpu.memory_space<vmem>>, vector<16x32xf32>
    tpu.vector_store %arg11[%c0_8, %c0_9], %12 {strides = array<i32>} : memref<16x32xf32, #tpu.memory_space<vmem>>, vector<16x32xf32>,
    %c0_10 = arith.constant 0 : index
    %c0_11 = arith.constant 0 : index
    %14 = vector.load %arg4[%c0_10, %c0_11] : memref<32x32xf32, #tpu.memory_space<vmem>>, vector<32x32xf32>
    %c0_12 = arith.constant 0 : index
    %c0_13 = arith.constant 0 : index
    %15 = vector.load %arg8[%c0_12, %c0_13] : memref<2x32xf32, #tpu.memory_space<vmem>>, vector<2x32xf32>
    %c0_i32 = arith.constant 0 : i32
    %c2_i32 = arith.constant 2 : i32
    %16 = arith.muli %c0_i32, %c2_i32 : i32
    %17 = tpu.assume_multiple %16, 2 : i32
    %18 = arith.index_cast %17 : i32 to index
    %c0_14 = arith.constant 0 : index
    %19 = vector.load %arg11[%18, %c0_14] : memref<16x32xf32, #tpu.memory_space<vmem>>, vector<2x32xf32>
    %cst_15 = arith.constant dense<0.000000e+00> : vector<2x32xf32>
    %20 = tpu.matmul %15, %14, %cst_15 {dimension_numbers = #tpu.dot_dimension_numbers<[1], [0], [0], [1], [0, 0, 1, 1], [], []>} : vector<2x32xf32>, vector<32x32xf32>, vector<2x32xf32> -> vector<2x32xf32>
    %21 = arith.addf %19, %20 : vector<2x32xf32>
    %22 = math.tanh %21 : vector<2x32xf32>
    %23 = arith.index_cast %17 : i32 to index
    %c0_16 = arith.constant 0 : index
    %24 = vector.load %arg11[%23, %c0_16] : memref<16x32xf32, #tpu.memory_space<vmem>>, vector<2x32xf32>
    tpu.vector_store %arg11[%23, %c0_16], %22 {strides = array<i32>} : memref<16x32xf32, #tpu.memory_space<vmem>>, vector<2x32xf32>,
    %c1_i32 = arith.constant 1 : i32
    %c2_i32_17 = arith.constant 2 : i32
    %25 = arith.muli %c1_i32, %c2_i32_17 : i32
    %26 = tpu.assume_multiple %25, 2 : i32
    %27 = arith.index_cast %26 : i32 to index
    %c0_18 = arith.constant 0 : index
    %28 = vector.load %arg11[%27, %c0_18] : memref<16x32xf32, #tpu.memory_space<vmem>>, vector<2x32xf32>
    %cst_19 = arith.constant dense<0.000000e+00> : vector<2x32xf32>
    %29 = tpu.matmul %22, %14, %cst_19 {dimension_numbers = #tpu.dot_dimension_numbers<[1], [0], [0], [1], [0, 0, 1, 1], [], []>} : vector<2x32xf32>, vector<32x32xf32>, vector<2x32xf32> -> vector<2x32xf32>
    %30 = arith.addf %28, %29 : vector<2x32xf32>
    %31 = math.tanh %30 : vector<2x32xf32>
    %32 = arith.index_cast %26 : i32 to index
    %c0_20 = arith.constant 0 : index
    %33 = vector.load %arg11[%32, %c0_20] : memref<16x32xf32, #tpu.memory_space<vmem>>, vector<2x32xf32>
    tpu.vector_store %arg11[%32, %c0_20], %31 {strides = array<i32>} : memref<16x32xf32, #tpu.memory_space<vmem>>, vector<2x32xf32>,
    %c2_i32_21 = arith.constant 2 : i32
    %c2_i32_22 = arith.constant 2 : i32
    %34 = arith.muli %c2_i32_21, %c2_i32_22 : i32
    %35 = tpu.assume_multiple %34, 2 : i32
    %36 = arith.index_cast %35 : i32 to index
    %c0_23 = arith.constant 0 : index
    %37 = vector.load %arg11[%36, %c0_23] : memref<16x32xf32, #tpu.memory_space<vmem>>, vector<2x32xf32>
    %cst_24 = arith.constant dense<0.000000e+00> : vector<2x32xf32>
    %38 = tpu.matmul %31, %14, %cst_24 {dimension_numbers = #tpu.dot_dimension_numbers<[1], [0], [0], [1], [0, 0, 1, 1], [], []>} : vector<2x32xf32>, vector<32x32xf32>, vector<2x32xf32> -> vector<2x32xf32>
    %39 = arith.addf %37, %38 : vector<2x32xf32>
    %40 = math.tanh %39 : vector<2x32xf32>
    %41 = arith.index_cast %35 : i32 to index
    %c0_25 = arith.constant 0 : index
    %42 = vector.load %arg11[%41, %c0_25] : memref<16x32xf32, #tpu.memory_space<vmem>>, vector<2x32xf32>
    tpu.vector_store %arg11[%41, %c0_25], %40 {strides = array<i32>} : memref<16x32xf32, #tpu.memory_space<vmem>>, vector<2x32xf32>,
    %c3_i32 = arith.constant 3 : i32
    %c2_i32_26 = arith.constant 2 : i32
    %43 = arith.muli %c3_i32, %c2_i32_26 : i32
    %44 = tpu.assume_multiple %43, 2 : i32
    %45 = arith.index_cast %44 : i32 to index
    %c0_27 = arith.constant 0 : index
    %46 = vector.load %arg11[%45, %c0_27] : memref<16x32xf32, #tpu.memory_space<vmem>>, vector<2x32xf32>
    %cst_28 = arith.constant dense<0.000000e+00> : vector<2x32xf32>
    %47 = tpu.matmul %40, %14, %cst_28 {dimension_numbers = #tpu.dot_dimension_numbers<[1], [0], [0], [1], [0, 0, 1, 1], [], []>} : vector<2x32xf32>, vector<32x32xf32>, vector<2x32xf32> -> vector<2x32xf32>
    %48 = arith.addf %46, %47 : vector<2x32xf32>
    %49 = math.tanh %48 : vector<2x32xf32>
    %50 = arith.index_cast %44 : i32 to index
    %c0_29 = arith.constant 0 : index
    %51 = vector.load %arg11[%50, %c0_29] : memref<16x32xf32, #tpu.memory_space<vmem>>, vector<2x32xf32>
    tpu.vector_store %arg11[%50, %c0_29], %49 {strides = array<i32>} : memref<16x32xf32, #tpu.memory_space<vmem>>, vector<2x32xf32>,
    %c4_i32 = arith.constant 4 : i32
    %c2_i32_30 = arith.constant 2 : i32
    %52 = arith.muli %c4_i32, %c2_i32_30 : i32
    %53 = tpu.assume_multiple %52, 2 : i32
    %54 = arith.index_cast %53 : i32 to index
    %c0_31 = arith.constant 0 : index
    %55 = vector.load %arg11[%54, %c0_31] : memref<16x32xf32, #tpu.memory_space<vmem>>, vector<2x32xf32>
    %cst_32 = arith.constant dense<0.000000e+00> : vector<2x32xf32>
    %56 = tpu.matmul %49, %14, %cst_32 {dimension_numbers = #tpu.dot_dimension_numbers<[1], [0], [0], [1], [0, 0, 1, 1], [], []>} : vector<2x32xf32>, vector<32x32xf32>, vector<2x32xf32> -> vector<2x32xf32>
    %57 = arith.addf %55, %56 : vector<2x32xf32>
    %58 = math.tanh %57 : vector<2x32xf32>
    %59 = arith.index_cast %53 : i32 to index
    %c0_33 = arith.constant 0 : index
    %60 = vector.load %arg11[%59, %c0_33] : memref<16x32xf32, #tpu.memory_space<vmem>>, vector<2x32xf32>
    tpu.vector_store %arg11[%59, %c0_33], %58 {strides = array<i32>} : memref<16x32xf32, #tpu.memory_space<vmem>>, vector<2x32xf32>,
    %c5_i32 = arith.constant 5 : i32
    %c2_i32_34 = arith.constant 2 : i32
    %61 = arith.muli %c5_i32, %c2_i32_34 : i32
    %62 = tpu.assume_multiple %61, 2 : i32
    %63 = arith.index_cast %62 : i32 to index
    %c0_35 = arith.constant 0 : index
    %64 = vector.load %arg11[%63, %c0_35] : memref<16x32xf32, #tpu.memory_space<vmem>>, vector<2x32xf32>
    %cst_36 = arith.constant dense<0.000000e+00> : vector<2x32xf32>
    %65 = tpu.matmul %58, %14, %cst_36 {dimension_numbers = #tpu.dot_dimension_numbers<[1], [0], [0], [1], [0, 0, 1, 1], [], []>} : vector<2x32xf32>, vector<32x32xf32>, vector<2x32xf32> -> vector<2x32xf32>
    %66 = arith.addf %64, %65 : vector<2x32xf32>
    %67 = math.tanh %66 : vector<2x32xf32>
    %68 = arith.index_cast %62 : i32 to index
    %c0_37 = arith.constant 0 : index
    %69 = vector.load %arg11[%68, %c0_37] : memref<16x32xf32, #tpu.memory_space<vmem>>, vector<2x32xf32>
    tpu.vector_store %arg11[%68, %c0_37], %67 {strides = array<i32>} : memref<16x32xf32, #tpu.memory_space<vmem>>, vector<2x32xf32>,
    %c6_i32 = arith.constant 6 : i32
    %c2_i32_38 = arith.constant 2 : i32
    %70 = arith.muli %c6_i32, %c2_i32_38 : i32
    %71 = tpu.assume_multiple %70, 2 : i32
    %72 = arith.index_cast %71 : i32 to index
    %c0_39 = arith.constant 0 : index
    %73 = vector.load %arg11[%72, %c0_39] : memref<16x32xf32, #tpu.memory_space<vmem>>, vector<2x32xf32>
    %cst_40 = arith.constant dense<0.000000e+00> : vector<2x32xf32>
    %74 = tpu.matmul %67, %14, %cst_40 {dimension_numbers = #tpu.dot_dimension_numbers<[1], [0], [0], [1], [0, 0, 1, 1], [], []>} : vector<2x32xf32>, vector<32x32xf32>, vector<2x32xf32> -> vector<2x32xf32>
    %75 = arith.addf %73, %74 : vector<2x32xf32>
    %76 = math.tanh %75 : vector<2x32xf32>
    %77 = arith.index_cast %71 : i32 to index
    %c0_41 = arith.constant 0 : index
    %78 = vector.load %arg11[%77, %c0_41] : memref<16x32xf32, #tpu.memory_space<vmem>>, vector<2x32xf32>
    tpu.vector_store %arg11[%77, %c0_41], %76 {strides = array<i32>} : memref<16x32xf32, #tpu.memory_space<vmem>>, vector<2x32xf32>,
    %c7_i32 = arith.constant 7 : i32
    %c2_i32_42 = arith.constant 2 : i32
    %79 = arith.muli %c7_i32, %c2_i32_42 : i32
    %80 = tpu.assume_multiple %79, 2 : i32
    %81 = arith.index_cast %80 : i32 to index
    %c0_43 = arith.constant 0 : index
    %82 = vector.load %arg11[%81, %c0_43] : memref<16x32xf32, #tpu.memory_space<vmem>>, vector<2x32xf32>
    %cst_44 = arith.constant dense<0.000000e+00> : vector<2x32xf32>
    %83 = tpu.matmul %76, %14, %cst_44 {dimension_numbers = #tpu.dot_dimension_numbers<[1], [0], [0], [1], [0, 0, 1, 1], [], []>} : vector<2x32xf32>, vector<32x32xf32>, vector<2x32xf32> -> vector<2x32xf32>
    %84 = arith.addf %82, %83 : vector<2x32xf32>
    %85 = math.tanh %84 : vector<2x32xf32>
    %86 = arith.index_cast %80 : i32 to index
    %c0_45 = arith.constant 0 : index
    %87 = vector.load %arg11[%86, %c0_45] : memref<16x32xf32, #tpu.memory_space<vmem>>, vector<2x32xf32>
    tpu.vector_store %arg11[%86, %c0_45], %85 {strides = array<i32>} : memref<16x32xf32, #tpu.memory_space<vmem>>, vector<2x32xf32>,
    %c8_i32 = arith.constant 8 : i32
    %c0_46 = arith.constant 0 : index
    %c0_47 = arith.constant 0 : index
    %88 = vector.load %arg10[%c0_46, %c0_47] : memref<2x32xf32, #tpu.memory_space<vmem>>, vector<2x32xf32>
    tpu.vector_store %arg10[%c0_46, %c0_47], %85 {strides = array<i32>} : memref<2x32xf32, #tpu.memory_space<vmem>>, vector<2x32xf32>,
    %c0_48 = arith.constant 0 : index
    %c0_49 = arith.constant 0 : index
    %89 = vector.load %arg11[%c0_48, %c0_49] : memref<16x32xf32, #tpu.memory_space<vmem>>, vector<16x32xf32>
    %c0_50 = arith.constant 0 : index
    %c0_51 = arith.constant 0 : index
    %90 = vector.load %arg5[%c0_50, %c0_51] : memref<32x16xf32, #tpu.memory_space<vmem>>, vector<32x16xf32>
    %cst_52 = arith.constant dense<0.000000e+00> : vector<16x16xf32>
    %91 = tpu.matmul %89, %90, %cst_52 {dimension_numbers = #tpu.dot_dimension_numbers<[1], [0], [0], [1], [0, 0, 1, 1], [], []>} : vector<16x32xf32>, vector<32x16xf32>, vector<16x16xf32> -> vector<16x16xf32>
    %c0_53 = arith.constant 0 : index
    %c0_54 = arith.constant 0 : index
    %92 = vector.load %arg7[%c0_53, %c0_54] : memref<1x16xf32, #tpu.memory_space<vmem>>, vector<1x16xf32>
    %93 = vector.broadcast %92 : vector<1x16xf32> to vector<16x16xf32>
    %94 = arith.addf %91, %93 : vector<16x16xf32>
    %c0_55 = arith.constant 0 : index
    %c0_56 = arith.constant 0 : index
    %95 = vector.load %arg9[%c0_55, %c0_56] : memref<16x16xf32, #tpu.memory_space<vmem>>, vector<16x16xf32>
    tpu.vector_store %arg9[%c0_55, %c0_56], %94 {strides = array<i32>} : memref<16x16xf32, #tpu.memory_space<vmem>>, vector<16x16xf32>,
    return
  }
  func.func @transform_0(%arg0: i32) -> (i32, i32) {
    %c0_i32 = arith.constant 0 : i32
    %c0_i32_0 = arith.constant 0 : i32
    %c0_i32_1 = arith.constant 0 : i32
    return %c0_i32, %c0_i32_0 : i32, i32
  }
  func.func @transform_1(%arg0: i32) -> (i32, i32) {
    %c0_i32 = arith.constant 0 : i32
    %c0_i32_0 = arith.constant 0 : i32
    %c0_i32_1 = arith.constant 0 : i32
    return %c0_i32, %c0_i32_0 : i32, i32
  }
  func.func @transform_2(%arg0: i32) -> (i32, i32) {
    %c0_i32 = arith.constant 0 : i32
    %c0_i32_0 = arith.constant 0 : i32
    %c0_i32_1 = arith.constant 0 : i32
    return %c0_i32, %c0_i32_0 : i32, i32
  }
  func.func @transform_3(%arg0: i32) -> (i32, i32) {
    %c0_i32 = arith.constant 0 : i32
    %c0_i32_0 = arith.constant 0 : i32
    %c0_i32_1 = arith.constant 0 : i32
    return %c0_i32, %c0_i32_0 : i32, i32
  }
  func.func @transform_4(%arg0: i32) -> (i32, i32) {
    %c0_i32 = arith.constant 0 : i32
    %c0_i32_0 = arith.constant 0 : i32
    %c0_i32_1 = arith.constant 0 : i32
    return %c0_i32, %c0_i32_0 : i32, i32
  }
  func.func @transform_5(%arg0: i32) -> (i32, i32) {
    %c0_i32 = arith.constant 0 : i32
    %c0_i32_0 = arith.constant 0 : i32
    %c0_i32_1 = arith.constant 0 : i32
    return %c0_i32, %c0_i32_0 : i32, i32
  }
  func.func @transform_6(%arg0: i32) -> (i32, i32) {
    %c0_i32 = arith.constant 0 : i32
    %c0_i32_0 = arith.constant 0 : i32
    %c0_i32_1 = arith.constant 0 : i32
    return %c0_i32, %c0_i32_0 : i32, i32
  }
  func.func @transform_7(%arg0: i32) -> (i32, i32) {
    %c0_i32 = arith.constant 0 : i32
    %c0_i32_0 = arith.constant 0 : i32
    %c0_i32_1 = arith.constant 0 : i32
    return %c0_i32, %c0_i32_0 : i32, i32
  }
  func.func @transform_8(%arg0: i32) -> (i32, i32) {
    %c0_i32 = arith.constant 0 : i32
    %c0_i32_0 = arith.constant 0 : i32
    %c0_i32_1 = arith.constant 0 : i32
    return %c0_i32, %c0_i32_0 : i32, i32
  }
  func.func @transform_9(%arg0: i32) -> (i32, i32) {
    %c0_i32 = arith.constant 0 : i32
    %c0_i32_0 = arith.constant 0 : i32
    %c0_i32_1 = arith.constant 0 : i32
    return %c0_i32, %c0_i32_0 : i32, i32
  }
}

</mosaic_0001>

<llo_original>
// kernel: tpu_custom_call.1
$region0: #{tpu_custom_call.1}
  #allocation0 [shape = 'u32[]', space=smem, size = 0x4, offset = 0x4, fixed_abs, tag = 'smem constant byte address 0x4 - core index']
  #allocation1 [shape = 'u32[144,128]{1,0:T(1,128)}', space=vmem, size = 0x12000, scoped, tag = 'internal scratch']
  #allocation2 [shape = 'f32[16,32]{1,0:T(8,128)}', space=vmem, size = 0x2000, scoped, tag = 'scratch operand']
  %s0 = inlined_call_operand.vmem [shape: s32[16,1], index: 0, kind: input, shape index: {}]
  %s1 = inlined_call_operand.hbm [shape: f32[16,32], index: 1, kind: input, shape index: {}]
  %s2 = inlined_call_operand.vmem [shape: f32[32,32], index: 2, kind: input, shape index: {}]
  %s3 = inlined_call_operand.vmem [shape: f32[32,32], index: 3, kind: input, shape index: {}]
  %s4 = inlined_call_operand.vmem [shape: f32[32,16], index: 4, kind: input, shape index: {}]
  %s5 = inlined_call_operand.vmem [shape: f32[1,32], index: 5, kind: input, shape index: {}]
  %s6 = inlined_call_operand.vmem [shape: f32[1,16], index: 6, kind: input, shape index: {}]
  %s7 = inlined_call_operand.vmem [shape: f32[2,32], index: 7, kind: input, shape index: {}]
  %s8 = inlined_call_operand.hbm [shape: f32[16,16], index: 8, kind: output, shape index: {0}]
  %s9 = inlined_call_operand.hbm [shape: f32[2,32], index: 9, kind: output, shape index: {1}]
  %10 = xla_tuple %s8, %s9
  %s11 = sld [smem:[#allocation0]]
  $region54: #{tpu_custom_call.1} parent=0
    _
  %s13 = ssub.s32 1, %s11
  %s14 = scalar_select 0, %s13, %s11
  $region1: #{tpu_custom_call.1} parent=0
    #allocation3 [shape = 'u8[8192]{0}', space=vmem, size = 0x2000, scoped, tag = 'input window, operand 1, single buffered']
    #allocation4 [shape = 's32[1]{0}', space=sflag, size = 0x4, scoped, tag = 'scoped memory for tpu_custom_call.1']
    #allocation5 [shape = 's32[1]{0}', space=sflag, size = 0x4, scoped, tag = 'scoped memory for tpu_custom_call.1']
    #allocation6 [shape = 'u8[8192]{0}', space=vmem, size = 0x2000, scoped, tag = 'output window, operand 0, single buffered']
    #allocation7 [shape = 'u8[1024]{0}', space=vmem, size = 0x400, scoped, tag = 'output window, operand 1, single buffered']
    #allocation8 [shape = 's32[1]{0}', space=sflag, size = 0x4, scoped, tag = 'scoped memory for tpu_custom_call.1']
    %15 = vsyncpa [#allocation4], 0
    %16 = vsyncpa [#allocation5], 0
    %17 = vsyncpa [#allocation8], 0
    // Predicated region
    $region2: #{tpu_custom_call.1} parent=1 // pred_check
      _
    $region3: #{tpu_custom_call.1} parent=1 // pred_check_branch
      %19 = sbr.rel (0) target = $region5
    $region4: #{tpu_custom_call.1} parent=1 // pred_region
      _
    $region5: #{tpu_custom_call.1} parent=1 // pred_fallthru
      _
    // Predicated region
    $region6: #{tpu_custom_call.1} parent=1 // pred_check
      _
    $region7: #{tpu_custom_call.1} parent=1 // pred_check_branch
      %21 = sbr.rel (0) target = $region9
    $region8: #{tpu_custom_call.1} parent=1 // pred_region
      %s23 = ssub.s32 256, 256
      %24 = vsyncadd [#allocation4], %s23
      %s25 = sshll.u32 [#allocation3], 4
      %s26 = int_to_ptr.vmem [resolvable:$true] %s25
      %31 = dma.hbm_to_vmem [thread:$0]  %s1, 256, %s26, [#allocation4], 128, 128, 8
    $region9: #{tpu_custom_call.1} parent=1 // pred_fallthru
      _
    // Predicated region
    $region10: #{tpu_custom_call.1} parent=1 // pred_check
      _
    $region11: #{tpu_custom_call.1} parent=1 // pred_check_branch
      %33 = sbr.rel (0) target = $region13
    $region12: #{tpu_custom_call.1} parent=1 // pred_region
      _
    $region13: #{tpu_custom_call.1} parent=1 // pred_fallthru
      _
    // Predicated region
    $region14: #{tpu_custom_call.1} parent=1 // pred_check
      _
    $region15: #{tpu_custom_call.1} parent=1 // pred_check_branch
      %35 = sbr.rel (0) target = $region17
    $region16: #{tpu_custom_call.1} parent=1 // pred_region
      _
    $region17: #{tpu_custom_call.1} parent=1 // pred_fallthru
      _
    // Predicated region
    $region18: #{tpu_custom_call.1} parent=1 // pred_check
      _
    $region19: #{tpu_custom_call.1} parent=1 // pred_check_branch
      %37 = sbr.rel (0) target = $region21
    $region20: #{tpu_custom_call.1} parent=1 // pred_region
      _
    $region21: #{tpu_custom_call.1} parent=1 // pred_fallthru
      _
    // Predicated region
    $region22: #{tpu_custom_call.1} parent=1 // pred_check
      _
    $region23: #{tpu_custom_call.1} parent=1 // pred_check_branch
      %39 = sbr.rel (0) target = $region25
    $region24: #{tpu_custom_call.1} parent=1 // pred_region
      _
    $region25: #{tpu_custom_call.1} parent=1 // pred_fallthru
      _
    // Predicated region
    $region26: #{tpu_custom_call.1} parent=1 // pred_check
      _
    $region27: #{tpu_custom_call.1} parent=1 // pred_check_branch
      %41 = sbr.rel (0) target = $region29
    $region28: #{tpu_custom_call.1} parent=1 // pred_region
      _
    $region29: #{tpu_custom_call.1} parent=1 // pred_fallthru
      _
    // Predicated region
    $region30: #{tpu_custom_call.1} parent=1 // pred_check
      _
    $region31: #{tpu_custom_call.1} parent=1 // pred_check_branch
      %43 = sbr.rel (0) target = $region33
    $region32: #{tpu_custom_call.1} parent=1 // pred_region
      _
    $region33: #{tpu_custom_call.1} parent=1 // pred_fallthru
      _
    // Predicated region
    $region34: #{tpu_custom_call.1} parent=1 // pred_check
      _
    $region35: #{tpu_custom_call.1} parent=1 // pred_check_branch
      %45 = sbr.rel (0) target = $region37
    $region36: #{tpu_custom_call.1} parent=1 // pred_region
      %46 = dma.done [#allocation4], 256
    $region37: #{tpu_custom_call.1} parent=1 // pred_fallthru
      _
    %v47 = vld [vmem:[#allocation3] sm:$0xff]
    %v48 = vld [vmem:[#allocation3 + $0x8] sm:$0xff]
    %v49 = vld [vmem:[%s2] sm:$0xff]
    %v50 = vld [vmem:[%s2 + $0x8] sm:$0xff]
    %v51 = vld [vmem:[%s2 + $0x10] sm:$0xff]
    %v52 = vld [vmem:[%s2 + $0x18] sm:$0xff]
    %vm53 = vcmask 261120
    %v55 = vsel %vm53, %v47, 0
    %v58 = vsel %vm53, %v48, 0
    %60 = vmatprep.subr.mxu0 0.0
    %61 = vmatpush1.msra.mxu0 %v49
    %62 = vmatprep.subr.mxu0 0.0
    %63 = vmatpush1.msra.mxu0 %v50
    %64 = vmatprep.subr.mxu0 0.0
    %65 = vmatpush1.msra.mxu0 %v51
    %66 = vmatprep.subr.mxu0 0.0
    %67 = vmatpush1.msra.mxu0 %v52
    %68 = vmatprep.subr.mxu0 0.0
    %69 = vmatpush1.msra.mxu0 0.0
    %70 = vmatprep.subr.mxu0 0.0
    %71 = vmatpush1.msra.mxu0 0.0
    %72 = vmatprep.subr.mxu0 0.0
    %73 = vmatpush1.msra.mxu0 0.0
    %74 = vmatprep.subr.mxu0 0.0
    %75 = vmatpush1.msra.mxu0 0.0
    %76 = vmatprep.subr.mxu0 0.0
    %77 = vmatpush1.msra.mxu0 0.0
    %78 = vmatprep.subr.mxu0 0.0
    %79 = vmatpush1.msra.mxu0 0.0
    %80 = vmatprep.subr.mxu0 0.0
    %81 = vmatpush1.msra.mxu0 0.0
    %82 = vmatprep.subr.mxu0 0.0
    %83 = vmatpush1.msra.mxu0 0.0
    %84 = vmatprep.subr.mxu0 0.0
    %85 = vmatpush1.msra.mxu0 0.0
    %86 = vmatprep.subr.mxu0 0.0
    %87 = vmatpush1.msra.mxu0 0.0
    %88 = vmatprep.subr.mxu0 0.0
    %89 = vmatpush1.msra.mxu0 0.0
    %90 = vmatprep.subr.mxu0 0.0
    %91 = vmatpush1.msra.mxu0 0.0
    %92 = vmatprep.subr.mxu0 0.0
    %93 = vmatpush1.msra.mxu0 0.0
    %94 = vmatprep.subr.mxu0 0.0
    %95 = vmatpush1.msra.mxu0 0.0
    %96 = vmatprep.subr.mxu0 0.0
    %97 = vmatpush1.msra.mxu0 0.0
    %98 = vmatprep.subr.mxu0 0.0
    %99 = vmatpush1.msra.mxu0 0.0
    %100 = vmatprep.subr.mxu0 0.0
    %101 = vmatpush1.msra.mxu0 0.0
    %102 = vmatprep.subr.mxu0 0.0
    %103 = vmatpush1.msra.mxu0 0.0
    %104 = vmatprep.subr.mxu0 0.0
    %105 = vmatpush1.msra.mxu0 0.0
    %106 = vmatprep.subr.mxu0 0.0
    %107 = vmatpush1.msra.mxu0 0.0
    %108 = vmatprep.subr.mxu0 0.0
    %109 = vmatpush1.msra.mxu0 0.0
    %110 = vmatprep.subr.mxu0 0.0
    %111 = vmatpush1.msra.mxu0 0.0
    %112 = vmatprep.subr.mxu0 0.0
    %113 = vmatpush1.msra.mxu0 0.0
    %114 = vmatprep.subr.mxu0 0.0
    %115 = vmatpush1.msra.mxu0 0.0
    %116 = vmatprep.subr.mxu0 0.0
    %117 = vmatpush1.msra.mxu0 0.0
    %118 = vmatprep.subr.mxu0 0.0
    %119 = vmatpush1.msra.mxu0 0.0
    %120 = vmatprep.subr.mxu0 0.0
    %121 = vmatpush1.msra.mxu0 0.0
    %122 = vmatprep.subr.mxu0 0.0
    %123 = vmatpush1.msra.mxu0 0.0
    %124 = vmatprep.mubr.f32.mxu0 0.0
    %125 = vmatmul.mubr.f32.gmra.mrb[0].mxu0 %v55
    %v126 = vpop.f32.mrb[0].mxu0
    %v127 = vadd.f32 0.0, %v126
    %v128 = vpop.f32.mrb[0].mxu0
    %129 = vmatprep.mubr.f32.mxu0 0.0
    %130 = vmatmul.mubr.f32.gmra.mrb[0].mxu0 %v58
    %v131 = vpop.f32.mrb[0].mxu0
    %v132 = vadd.f32 0.0, %v131
    %v133 = vpop.f32.mrb[0].mxu0
    %134 = vdwg.mxu0
    %v135 = vld [vmem:[%s0] sm:$0xff]
    %v136 = vld [vmem:[%s0 + $0x8] sm:$0xff]
    %v137 = vlaneseq
    %v138 = vand.u32 %v137, 127
    %139 = vset.pattern.permute.xlu0 0
    %140 = vperm.xlu0 %139, %v135
    %v141 = vpop.permute.xlu0 %140
    %142 = vset.pattern.permute.xlu0 0
    %143 = vperm.xlu0 %142, %v136
    %v144 = vpop.permute.xlu0 %143
    %vm145 = vcmp.eq.s32.totalorder %v141, %v138
    %vm146 = vcmp.eq.s32.totalorder %v144, %v138
    %v147 = vsel %vm145, 1, 0
    %v148 = vsel %vm146, 1, 0
    %v149 = vcvt.s32.f32 %v147
    %v150 = vcvt.s32.f32 %v148
    %v151 = vld [vmem:[%s5] sm:$0x1]
    %v153 = vlaneseq
    %v154 = vshrl.u32 %v153, 7
    %v155 = vsub.s32 0, %v154
    %v156 = vrot.slane %v151, %v155
    %vm158 = vcmask 130048
    %v160 = vsel %vm158, %v149, 0
    %v163 = vsel %vm158, %v150, 0
    %165 = vmatprep.subr.mxu0 0.0
    %166 = vmatpush1.msra.mxu0 %v127
    %167 = vmatprep.subr.mxu0 0.0
    %168 = vmatpush1.msra.mxu0 %v132
    %169 = vmatprep.subr.mxu0 0.0
    %170 = vmatpush1.msra.mxu0 0.0
    %171 = vmatprep.subr.mxu0 0.0
    %172 = vmatpush1.msra.mxu0 0.0
    %173 = vmatprep.subr.mxu0 0.0
    %174 = vmatpush1.msra.mxu0 0.0
    %175 = vmatprep.subr.mxu0 0.0
    %176 = vmatpush1.msra.mxu0 0.0
    %177 = vmatprep.subr.mxu0 0.0
    %178 = vmatpush1.msra.mxu0 0.0
    %179 = vmatprep.subr.mxu0 0.0
    %180 = vmatpush1.msra.mxu0 0.0
    %181 = vmatprep.subr.mxu0 0.0
    %182 = vmatpush1.msra.mxu0 0.0
    %183 = vmatprep.subr.mxu0 0.0
    %184 = vmatpush1.msra.mxu0 0.0
    %185 = vmatprep.subr.mxu0 0.0
    %186 = vmatpush1.msra.mxu0 0.0
    %187 = vmatprep.subr.mxu0 0.0
    %188 = vmatpush1.msra.mxu0 0.0
    %189 = vmatprep.subr.mxu0 0.0
    %190 = vmatpush1.msra.mxu0 0.0
    %191 = vmatprep.subr.mxu0 0.0
    %192 = vmatpush1.msra.mxu0 0.0
    %193 = vmatprep.subr.mxu0 0.0
    %194 = vmatpush1.msra.mxu0 0.0
    %195 = vmatprep.subr.mxu0 0.0
    %196 = vmatpush1.msra.mxu0 0.0
    %197 = vmatprep.subr.mxu0 0.0
    %198 = vmatpush1.msra.mxu0 0.0
    %199 = vmatprep.subr.mxu0 0.0
    %200 = vmatpush1.msra.mxu0 0.0
    %201 = vmatprep.subr.mxu0 0.0
    %202 = vmatpush1.msra.mxu0 0.0
    %203 = vmatprep.subr.mxu0 0.0
    %204 = vmatpush1.msra.mxu0 0.0
    %205 = vmatprep.subr.mxu0 0.0
    %206 = vmatpush1.msra.mxu0 0.0
    %207 = vmatprep.subr.mxu0 0.0
    %208 = vmatpush1.msra.mxu0 0.0
    %209 = vmatprep.subr.mxu0 0.0
    %210 = vmatpush1.msra.mxu0 0.0
    %211 = vmatprep.subr.mxu0 0.0
    %212 = vmatpush1.msra.mxu0 0.0
    %213 = vmatprep.subr.mxu0 0.0
    %214 = vmatpush1.msra.mxu0 0.0
    %215 = vmatprep.subr.mxu0 0.0
    %216 = vmatpush1.msra.mxu0 0.0
    %217 = vmatprep.subr.mxu0 0.0
    %218 = vmatpush1.msra.mxu0 0.0
    %219 = vmatprep.subr.mxu0 0.0
    %220 = vmatpush1.msra.mxu0 0.0
    %221 = vmatprep.subr.mxu0 0.0
    %222 = vmatpush1.msra.mxu0 0.0
    %223 = vmatprep.subr.mxu0 0.0
    %224 = vmatpush1.msra.mxu0 0.0
    %225 = vmatprep.subr.mxu0 0.0
    %226 = vmatpush1.msra.mxu0 0.0
    %227 = vmatprep.subr.mxu0 0.0
    %228 = vmatpush1.msra.mxu0 0.0
    %229 = vmatprep.mubr.f32.mxu0 0.0
    %230 = vmatmul.mubr.f32.gmra.mrb[0].mxu0 %v160
    %v231 = vpop.f32.mrb[0].mxu0
    %v232 = vadd.f32 %v156, %v231
    %v233 = vpop.f32.mrb[0].mxu0
    %234 = vmatprep.mubr.f32.mxu0 0.0
    %235 = vmatmul.mubr.f32.gmra.mrb[0].mxu0 %v163
    %v236 = vpop.f32.mrb[0].mxu0
    %v237 = vadd.f32 %v156, %v236
    %v238 = vpop.f32.mrb[0].mxu0
    %239 = vdwg.mxu0
    %240 = vst.msk [vmem:[#allocation2] sm:$0xff] %vm53, %v232
    %241 = vst.msk [vmem:[#allocation2 + $0x8] sm:$0xff] %vm53, %v237
    %v242 = vld [vmem:[%s3] sm:$0xff]
    %v243 = vld [vmem:[%s3 + $0x8] sm:$0xff]
    %v244 = vld [vmem:[%s3 + $0x10] sm:$0xff]
    %v245 = vld [vmem:[%s3 + $0x18] sm:$0xff]
    %v246 = vld [vmem:[%s7] sm:$0x3]
    %v247 = vld [vmem:[#allocation2] sm:$0x3]
    %v249 = vsel %vm53, %v246, 0
    %251 = vmatprep.subr.mxu0 0.0
    %252 = vmatpush1.msra.mxu0 %v242
    %253 = vmatprep.subr.mxu0 0.0
    %254 = vmatpush1.msra.mxu0 %v243
    %255 = vmatprep.subr.mxu0 0.0
    %256 = vmatpush1.msra.mxu0 %v244
    %257 = vmatprep.subr.mxu0 0.0
    %258 = vmatpush1.msra.mxu0 %v245
    %259 = vmatprep.subr.mxu0 0.0
    %260 = vmatpush1.msra.mxu0 0.0
    %261 = vmatprep.subr.mxu0 0.0
    %262 = vmatpush1.msra.mxu0 0.0
    %263 = vmatprep.subr.mxu0 0.0
    %264 = vmatpush1.msra.mxu0 0.0
    %265 = vmatprep.subr.mxu0 0.0
    %266 = vmatpush1.msra.mxu0 0.0
    %267 = vmatprep.subr.mxu0 0.0
    %268 = vmatpush1.msra.mxu0 0.0
    %269 = vmatprep.subr.mxu0 0.0
    %270 = vmatpush1.msra.mxu0 0.0
    %271 = vmatprep.subr.mxu0 0.0
    %272 = vmatpush1.msra.mxu0 0.0
    %273 = vmatprep.subr.mxu0 0.0
    %274 = vmatpush1.msra.mxu0 0.0
    %275 = vmatprep.subr.mxu0 0.0
    %276 = vmatpush1.msra.mxu0 0.0
    %277 = vmatprep.subr.mxu0 0.0
    %278 = vmatpush1.msra.mxu0 0.0
    %279 = vmatprep.subr.mxu0 0.0
    %280 = vmatpush1.msra.mxu0 0.0
    %281 = vmatprep.subr.mxu0 0.0
    %282 = vmatpush1.msra.mxu0 0.0
    %283 = vmatprep.subr.mxu0 0.0
    %284 = vmatpush1.msra.mxu0 0.0
    %285 = vmatprep.subr.mxu0 0.0
    %286 = vmatpush1.msra.mxu0 0.0
    %287 = vmatprep.subr.mxu0 0.0
    %288 = vmatpush1.msra.mxu0 0.0
    %289 = vmatprep.subr.mxu0 0.0
    %290 = vmatpush1.msra.mxu0 0.0
    %291 = vmatprep.subr.mxu0 0.0
    %292 = vmatpush1.msra.mxu0 0.0
    %293 = vmatprep.subr.mxu0 0.0
    %294 = vmatpush1.msra.mxu0 0.0
    %295 = vmatprep.subr.mxu0 0.0
    %296 = vmatpush1.msra.mxu0 0.0
    %297 = vmatprep.subr.mxu0 0.0
    %298 = vmatpush1.msra.mxu0 0.0
    %299 = vmatprep.subr.mxu0 0.0
    %300 = vmatpush1.msra.mxu0 0.0
    %301 = vmatprep.subr.mxu0 0.0
    %302 = vmatpush1.msra.mxu0 0.0
    %303 = vmatprep.subr.mxu0 0.0
    %304 = vmatpush1.msra.mxu0 0.0
    %305 = vmatprep.subr.mxu0 0.0
    %306 = vmatpush1.msra.mxu0 0.0
    %307 = vmatprep.subr.mxu0 0.0
    %308 = vmatpush1.msra.mxu0 0.0
    %309 = vmatprep.subr.mxu0 0.0
    %310 = vmatpush1.msra.mxu0 0.0
    %311 = vmatprep.subr.mxu0 0.0
    %312 = vmatpush1.msra.mxu0 0.0
    %313 = vmatprep.subr.mxu0 0.0
    %314 = vmatpush1.msra.mxu0 0.0
    %315 = vmatprep.mubr.f32.mxu0 0.0
    %316 = vmatmul.mubr.f32.gmra.mrb[0].mxu0 %v249
    %v317 = vpop.f32.mrb[0].mxu0
    %v318 = vadd.f32 0.0, %v317
    %v319 = vpop.f32.mrb[0].mxu0
    %320 = vdwg.mxu0
    %v321 = vadd.f32 %v247, %v318
    %v322 = vtanh.pop %v321
    %vm323 = vcmask 254976
    %324 = vst.msk [vmem:[#allocation2] sm:$0x3] %vm323, %v322
    %s325 = scalar_lea.vmem [#allocation2], 2
    %v326 = vld [vmem:[%s325] sm:$0x3]
    %v328 = vsel %vm53, %v322, 0
    %330 = vmatprep.subr.mxu0 0.0
    %331 = vmatpush1.msra.mxu0 %v242
    %332 = vmatprep.subr.mxu0 0.0
    %333 = vmatpush1.msra.mxu0 %v243
    %334 = vmatprep.subr.mxu0 0.0
    %335 = vmatpush1.msra.mxu0 %v244
    %336 = vmatprep.subr.mxu0 0.0
    %337 = vmatpush1.msra.mxu0 %v245
    %338 = vmatprep.subr.mxu0 0.0
    %339 = vmatpush1.msra.mxu0 0.0
    %340 = vmatprep.subr.mxu0 0.0
    %341 = vmatpush1.msra.mxu0 0.0
    %342 = vmatprep.subr.mxu0 0.0
    %343 = vmatpush1.msra.mxu0 0.0
    %344 = vmatprep.subr.mxu0 0.0
    %345 = vmatpush1.msra.mxu0 0.0
    %346 = vmatprep.subr.mxu0 0.0
    %347 = vmatpush1.msra.mxu0 0.0
    %348 = vmatprep.subr.mxu0 0.0
    %349 = vmatpush1.msra.mxu0 0.0
    %350 = vmatprep.subr.mxu0 0.0
    %351 = vmatpush1.msra.mxu0 0.0
    %352 = vmatprep.subr.mxu0 0.0
    %353 = vmatpush1.msra.mxu0 0.0
    %354 = vmatprep.subr.mxu0 0.0
    %355 = vmatpush1.msra.mxu0 0.0
    %356 = vmatprep.subr.mxu0 0.0
    %357 = vmatpush1.msra.mxu0 0.0
    %358 = vmatprep.subr.mxu0 0.0
    %359 = vmatpush1.msra.mxu0 0.0
    %360 = vmatprep.subr.mxu0 0.0
    %361 = vmatpush1.msra.mxu0 0.0
    %362 = vmatprep.subr.mxu0 0.0
    %363 = vmatpush1.msra.mxu0 0.0
    %364 = vmatprep.subr.mxu0 0.0
    %365 = vmatpush1.msra.mxu0 0.0
    %366 = vmatprep.subr.mxu0 0.0
    %367 = vmatpush1.msra.mxu0 0.0
    %368 = vmatprep.subr.mxu0 0.0
    %369 = vmatpush1.msra.mxu0 0.0
    %370 = vmatprep.subr.mxu0 0.0
    %371 = vmatpush1.msra.mxu0 0.0
    %372 = vmatprep.subr.mxu0 0.0
    %373 = vmatpush1.msra.mxu0 0.0
    %374 = vmatprep.subr.mxu0 0.0
    %375 = vmatpush1.msra.mxu0 0.0
    %376 = vmatprep.subr.mxu0 0.0
    %377 = vmatpush1.msra.mxu0 0.0
    %378 = vmatprep.subr.mxu0 0.0
    %379 = vmatpush1.msra.mxu0 0.0
    %380 = vmatprep.subr.mxu0 0.0
    %381 = vmatpush1.msra.mxu0 0.0
    %382 = vmatprep.subr.mxu0 0.0
    %383 = vmatpush1.msra.mxu0 0.0
    %384 = vmatprep.subr.mxu0 0.0
    %385 = vmatpush1.msra.mxu0 0.0
    %386 = vmatprep.subr.mxu0 0.0
    %387 = vmatpush1.msra.mxu0 0.0
    %388 = vmatprep.subr.mxu0 0.0
    %389 = vmatpush1.msra.mxu0 0.0
    %390 = vmatprep.subr.mxu0 0.0
    %391 = vmatpush1.msra.mxu0 0.0
    %392 = vmatprep.subr.mxu0 0.0
    %393 = vmatpush1.msra.mxu0 0.0
    %394 = vmatprep.mubr.f32.mxu0 0.0
    %395 = vmatmul.mubr.f32.gmra.mrb[0].mxu0 %v328
    %v396 = vpop.f32.mrb[0].mxu0
    %v397 = vadd.f32 0.0, %v396
    %v398 = vpop.f32.mrb[0].mxu0
    %399 = vdwg.mxu0
    %v400 = vadd.f32 %v326, %v397
    %v401 = vtanh.pop %v400
    %402 = vst.msk [vmem:[%s325] sm:$0x3] %vm323, %v401
    %s403 = scalar_lea.vmem [#allocation2], 4
    %v404 = vld [vmem:[%s403] sm:$0x3]
    %v406 = vsel %vm53, %v401, 0
    %408 = vmatprep.subr.mxu0 0.0
    %409 = vmatpush1.msra.mxu0 %v242
    %410 = vmatprep.subr.mxu0 0.0
    %411 = vmatpush1.msra.mxu0 %v243
    %412 = vmatprep.subr.mxu0 0.0
    %413 = vmatpush1.msra.mxu0 %v244
    %414 = vmatprep.subr.mxu0 0.0
    %415 = vmatpush1.msra.mxu0 %v245
    %416 = vmatprep.subr.mxu0 0.0
    %417 = vmatpush1.msra.mxu0 0.0
    %418 = vmatprep.subr.mxu0 0.0
    %419 = vmatpush1.msra.mxu0 0.0
    %420 = vmatprep.subr.mxu0 0.0
    %421 = vmatpush1.msra.mxu0 0.0
    %422 = vmatprep.subr.mxu0 0.0
    %423 = vmatpush1.msra.mxu0 0.0
    %424 = vmatprep.subr.mxu0 0.0
    %425 = vmatpush1.msra.mxu0 0.0
    %426 = vmatprep.subr.mxu0 0.0
    %427 = vmatpush1.msra.mxu0 0.0
    %428 = vmatprep.subr.mxu0 0.0
    %429 = vmatpush1.msra.mxu0 0.0
    %430 = vmatprep.subr.mxu0 0.0
    %431 = vmatpush1.msra.mxu0 0.0
    %432 = vmatprep.subr.mxu0 0.0
    %433 = vmatpush1.msra.mxu0 0.0
    %434 = vmatprep.subr.mxu0 0.0
    %435 = vmatpush1.msra.mxu0 0.0
    %436 = vmatprep.subr.mxu0 0.0
    %437 = vmatpush1.msra.mxu0 0.0
    %438 = vmatprep.subr.mxu0 0.0
    %439 = vmatpush1.msra.mxu0 0.0
    %440 = vmatprep.subr.mxu0 0.0
    %441 = vmatpush1.msra.mxu0 0.0
    %442 = vmatprep.subr.mxu0 0.0
    %443 = vmatpush1.msra.mxu0 0.0
    %444 = vmatprep.subr.mxu0 0.0
    %445 = vmatpush1.msra.mxu0 0.0
    %446 = vmatprep.subr.mxu0 0.0
    %447 = vmatpush1.msra.mxu0 0.0
    %448 = vmatprep.subr.mxu0 0.0
    %449 = vmatpush1.msra.mxu0 0.0
    %450 = vmatprep.subr.mxu0 0.0
    %451 = vmatpush1.msra.mxu0 0.0
    %452 = vmatprep.subr.mxu0 0.0
    %453 = vmatpush1.msra.mxu0 0.0
    %454 = vmatprep.subr.mxu0 0.0
    %455 = vmatpush1.msra.mxu0 0.0
    %456 = vmatprep.subr.mxu0 0.0
    %457 = vmatpush1.msra.mxu0 0.0
    %458 = vmatprep.subr.mxu0 0.0
    %459 = vmatpush1.msra.mxu0 0.0
    %460 = vmatprep.subr.mxu0 0.0
    %461 = vmatpush1.msra.mxu0 0.0
    %462 = vmatprep.subr.mxu0 0.0
    %463 = vmatpush1.msra.mxu0 0.0
    %464 = vmatprep.subr.mxu0 0.0
    %465 = vmatpush1.msra.mxu0 0.0
    %466 = vmatprep.subr.mxu0 0.0
    %467 = vmatpush1.msra.mxu0 0.0
    %468 = vmatprep.subr.mxu0 0.0
    %469 = vmatpush1.msra.mxu0 0.0
    %470 = vmatprep.subr.mxu0 0.0
    %471 = vmatpush1.msra.mxu0 0.0
    %472 = vmatprep.mubr.f32.mxu0 0.0
    %473 = vmatmul.mubr.f32.gmra.mrb[0].mxu0 %v406
    %v474 = vpop.f32.mrb[0].mxu0
    %v475 = vadd.f32 0.0, %v474
    %v476 = vpop.f32.mrb[0].mxu0
    %477 = vdwg.mxu0
    %v478 = vadd.f32 %v404, %v475
    %v479 = vtanh.pop %v478
    %480 = vst.msk [vmem:[%s403] sm:$0x3] %vm323, %v479
    %s481 = scalar_lea.vmem [#allocation2], 6
    %v482 = vld [vmem:[%s481] sm:$0x3]
    %v484 = vsel %vm53, %v479, 0
    %486 = vmatprep.subr.mxu0 0.0
    %487 = vmatpush1.msra.mxu0 %v242
    %488 = vmatprep.subr.mxu0 0.0
    %489 = vmatpush1.msra.mxu0 %v243
    %490 = vmatprep.subr.mxu0 0.0
    %491 = vmatpush1.msra.mxu0 %v244
    %492 = vmatprep.subr.mxu0 0.0
    %493 = vmatpush1.msra.mxu0 %v245
    %494 = vmatprep.subr.mxu0 0.0
    %495 = vmatpush1.msra.mxu0 0.0
    %496 = vmatprep.subr.mxu0 0.0
    %497 = vmatpush1.msra.mxu0 0.0
    %498 = vmatprep.subr.mxu0 0.0
    %499 = vmatpush1.msra.mxu0 0.0
    %500 = vmatprep.subr.mxu0 0.0
    %501 = vmatpush1.msra.mxu0 0.0
    %502 = vmatprep.subr.mxu0 0.0
    %503 = vmatpush1.msra.mxu0 0.0
    %504 = vmatprep.subr.mxu0 0.0
    %505 = vmatpush1.msra.mxu0 0.0
    %506 = vmatprep.subr.mxu0 0.0
    %507 = vmatpush1.msra.mxu0 0.0
    %508 = vmatprep.subr.mxu0 0.0
    %509 = vmatpush1.msra.mxu0 0.0
    %510 = vmatprep.subr.mxu0 0.0
    %511 = vmatpush1.msra.mxu0 0.0
    %512 = vmatprep.subr.mxu0 0.0
    %513 = vmatpush1.msra.mxu0 0.0
    %514 = vmatprep.subr.mxu0 0.0
    %515 = vmatpush1.msra.mxu0 0.0
    %516 = vmatprep.subr.mxu0 0.0
    %517 = vmatpush1.msra.mxu0 0.0
    %518 = vmatprep.subr.mxu0 0.0
    %519 = vmatpush1.msra.mxu0 0.0
    %520 = vmatprep.subr.mxu0 0.0
    %521 = vmatpush1.msra.mxu0 0.0
    %522 = vmatprep.subr.mxu0 0.0
    %523 = vmatpush1.msra.mxu0 0.0
    %524 = vmatprep.subr.mxu0 0.0
    %525 = vmatpush1.msra.mxu0 0.0
    %526 = vmatprep.subr.mxu0 0.0
    %527 = vmatpush1.msra.mxu0 0.0
    %528 = vmatprep.subr.mxu0 0.0
    %529 = vmatpush1.msra.mxu0 0.0
    %530 = vmatprep.subr.mxu0 0.0
    %531 = vmatpush1.msra.mxu0 0.0
    %532 = vmatprep.subr.mxu0 0.0
    %533 = vmatpush1.msra.mxu0 0.0
    %534 = vmatprep.subr.mxu0 0.0
    %535 = vmatpush1.msra.mxu0 0.0
    %536 = vmatprep.subr.mxu0 0.0
    %537 = vmatpush1.msra.mxu0 0.0
    %538 = vmatprep.subr.mxu0 0.0
    %539 = vmatpush1.msra.mxu0 0.0
    %540 = vmatprep.subr.mxu0 0.0
    %541 = vmatpush1.msra.mxu0 0.0
    %542 = vmatprep.subr.mxu0 0.0
    %543 = vmatpush1.msra.mxu0 0.0
    %544 = vmatprep.subr.mxu0 0.0
    %545 = vmatpush1.msra.mxu0 0.0
    %546 = vmatprep.subr.mxu0 0.0
    %547 = vmatpush1.msra.mxu0 0.0
    %548 = vmatprep.subr.mxu0 0.0
    %549 = vmatpush1.msra.mxu0 0.0
    %550 = vmatprep.mubr.f32.mxu0 0.0
    %551 = vmatmul.mubr.f32.gmra.mrb[0].mxu0 %v484
    %v552 = vpop.f32.mrb[0].mxu0
    %v553 = vadd.f32 0.0, %v552
    %v554 = vpop.f32.mrb[0].mxu0
    %555 = vdwg.mxu0
    %v556 = vadd.f32 %v482, %v553
    %v557 = vtanh.pop %v556
    %558 = vst.msk [vmem:[%s481] sm:$0x3] %vm323, %v557
    %s559 = scalar_lea.vmem [#allocation2], 8
    %v560 = vld [vmem:[%s559] sm:$0x3]
    %v562 = vsel %vm53, %v557, 0
    %564 = vmatprep.subr.mxu0 0.0
    %565 = vmatpush1.msra.mxu0 %v242
    %566 = vmatprep.subr.mxu0 0.0
    %567 = vmatpush1.msra.mxu0 %v243
    %568 = vmatprep.subr.mxu0 0.0
    %569 = vmatpush1.msra.mxu0 %v244
    %570 = vmatprep.subr.mxu0 0.0
    %571 = vmatpush1.msra.mxu0 %v245
    %572 = vmatprep.subr.mxu0 0.0
    %573 = vmatpush1.msra.mxu0 0.0
    %574 = vmatprep.subr.mxu0 0.0
    %575 = vmatpush1.msra.mxu0 0.0
    %576 = vmatprep.subr.mxu0 0.0
    %577 = vmatpush1.msra.mxu0 0.0
    %578 = vmatprep.subr.mxu0 0.0
    %579 = vmatpush1.msra.mxu0 0.0
    %580 = vmatprep.subr.mxu0 0.0
    %581 = vmatpush1.msra.mxu0 0.0
    %582 = vmatprep.subr.mxu0 0.0
    %583 = vmatpush1.msra.mxu0 0.0
    %584 = vmatprep.subr.mxu0 0.0
    %585 = vmatpush1.msra.mxu0 0.0
    %586 = vmatprep.subr.mxu0 0.0
    %587 = vmatpush1.msra.mxu0 0.0
    %588 = vmatprep.subr.mxu0 0.0
    %589 = vmatpush1.msra.mxu0 0.0
    %590 = vmatprep.subr.mxu0 0.0
    %591 = vmatpush1.msra.mxu0 0.0
    %592 = vmatprep.subr.mxu0 0.0
    %593 = vmatpush1.msra.mxu0 0.0
    %594 = vmatprep.subr.mxu0 0.0
    %595 = vmatpush1.msra.mxu0 0.0
    %596 = vmatprep.subr.mxu0 0.0
    %597 = vmatpush1.msra.mxu0 0.0
    %598 = vmatprep.subr.mxu0 0.0
    %599 = vmatpush1.msra.mxu0 0.0
    %600 = vmatprep.subr.mxu0 0.0
    %601 = vmatpush1.msra.mxu0 0.0
    %602 = vmatprep.subr.mxu0 0.0
    %603 = vmatpush1.msra.mxu0 0.0
    %604 = vmatprep.subr.mxu0 0.0
    %605 = vmatpush1.msra.mxu0 0.0
    %606 = vmatprep.subr.mxu0 0.0
    %607 = vmatpush1.msra.mxu0 0.0
    %608 = vmatprep.subr.mxu0 0.0
    %609 = vmatpush1.msra.mxu0 0.0
    %610 = vmatprep.subr.mxu0 0.0
    %611 = vmatpush1.msra.mxu0 0.0
    %612 = vmatprep.subr.mxu0 0.0
    %613 = vmatpush1.msra.mxu0 0.0
    %614 = vmatprep.subr.mxu0 0.0
    %615 = vmatpush1.msra.mxu0 0.0
    %616 = vmatprep.subr.mxu0 0.0
    %617 = vmatpush1.msra.mxu0 0.0
    %618 = vmatprep.subr.mxu0 0.0
    %619 = vmatpush1.msra.mxu0 0.0
    %620 = vmatprep.subr.mxu0 0.0
    %621 = vmatpush1.msra.mxu0 0.0
    %622 = vmatprep.subr.mxu0 0.0
    %623 = vmatpush1.msra.mxu0 0.0
    %624 = vmatprep.subr.mxu0 0.0
    %625 = vmatpush1.msra.mxu0 0.0
    %626 = vmatprep.subr.mxu0 0.0
    %627 = vmatpush1.msra.mxu0 0.0
    %628 = vmatprep.mubr.f32.mxu0 0.0
    %629 = vmatmul.mubr.f32.gmra.mrb[0].mxu0 %v562
    %v630 = vpop.f32.mrb[0].mxu0
    %v631 = vadd.f32 0.0, %v630
    %v632 = vpop.f32.mrb[0].mxu0
    %633 = vdwg.mxu0
    %v634 = vadd.f32 %v560, %v631
    %v635 = vtanh.pop %v634
    %636 = vst.msk [vmem:[%s559] sm:$0x3] %vm323, %v635
    %s637 = scalar_lea.vmem [#allocation2], 10
    %v638 = vld [vmem:[%s637] sm:$0x3]
    %v640 = vsel %vm53, %v635, 0
    %642 = vmatprep.subr.mxu0 0.0
    %643 = vmatpush1.msra.mxu0 %v242
    %644 = vmatprep.subr.mxu0 0.0
    %645 = vmatpush1.msra.mxu0 %v243
    %646 = vmatprep.subr.mxu0 0.0
    %647 = vmatpush1.msra.mxu0 %v244
    %648 = vmatprep.subr.mxu0 0.0
    %649 = vmatpush1.msra.mxu0 %v245
    %650 = vmatprep.subr.mxu0 0.0
    %651 = vmatpush1.msra.mxu0 0.0
    %652 = vmatprep.subr.mxu0 0.0
    %653 = vmatpush1.msra.mxu0 0.0
    %654 = vmatprep.subr.mxu0 0.0
    %655 = vmatpush1.msra.mxu0 0.0
    %656 = vmatprep.subr.mxu0 0.0
    %657 = vmatpush1.msra.mxu0 0.0
    %658 = vmatprep.subr.mxu0 0.0
    %659 = vmatpush1.msra.mxu0 0.0
    %660 = vmatprep.subr.mxu0 0.0
    %661 = vmatpush1.msra.mxu0 0.0
    %662 = vmatprep.subr.mxu0 0.0
    %663 = vmatpush1.msra.mxu0 0.0
    %664 = vmatprep.subr.mxu0 0.0
    %665 = vmatpush1.msra.mxu0 0.0
    %666 = vmatprep.subr.mxu0 0.0
    %667 = vmatpush1.msra.mxu0 0.0
    %668 = vmatprep.subr.mxu0 0.0
    %669 = vmatpush1.msra.mxu0 0.0
    %670 = vmatprep.subr.mxu0 0.0
    %671 = vmatpush1.msra.mxu0 0.0
    %672 = vmatprep.subr.mxu0 0.0
    %673 = vmatpush1.msra.mxu0 0.0
    %674 = vmatprep.subr.mxu0 0.0
    %675 = vmatpush1.msra.mxu0 0.0
    %676 = vmatprep.subr.mxu0 0.0
    %677 = vmatpush1.msra.mxu0 0.0
    %678 = vmatprep.subr.mxu0 0.0
    %679 = vmatpush1.msra.mxu0 0.0
    %680 = vmatprep.subr.mxu0 0.0
    %681 = vmatpush1.msra.mxu0 0.0
    %682 = vmatprep.subr.mxu0 0.0
    %683 = vmatpush1.msra.mxu0 0.0
    %684 = vmatprep.subr.mxu0 0.0
    %685 = vmatpush1.msra.mxu0 0.0
    %686 = vmatprep.subr.mxu0 0.0
    %687 = vmatpush1.msra.mxu0 0.0
    %688 = vmatprep.subr.mxu0 0.0
    %689 = vmatpush1.msra.mxu0 0.0
    %690 = vmatprep.subr.mxu0 0.0
    %691 = vmatpush1.msra.mxu0 0.0
    %692 = vmatprep.subr.mxu0 0.0
    %693 = vmatpush1.msra.mxu0 0.0
    %694 = vmatprep.subr.mxu0 0.0
    %695 = vmatpush1.msra.mxu0 0.0
    %696 = vmatprep.subr.mxu0 0.0
    %697 = vmatpush1.msra.mxu0 0.0
    %698 = vmatprep.subr.mxu0 0.0
    %699 = vmatpush1.msra.mxu0 0.0
    %700 = vmatprep.subr.mxu0 0.0
    %701 = vmatpush1.msra.mxu0 0.0
    %702 = vmatprep.subr.mxu0 0.0
    %703 = vmatpush1.msra.mxu0 0.0
    %704 = vmatprep.subr.mxu0 0.0
    %705 = vmatpush1.msra.mxu0 0.0
    %706 = vmatprep.mubr.f32.mxu0 0.0
    %707 = vmatmul.mubr.f32.gmra.mrb[0].mxu0 %v640
    %v708 = vpop.f32.mrb[0].mxu0
    %v709 = vadd.f32 0.0, %v708
    %v710 = vpop.f32.mrb[0].mxu0
    %711 = vdwg.mxu0
    %v712 = vadd.f32 %v638, %v709
    %v713 = vtanh.pop %v712
    %714 = vst.msk [vmem:[%s637] sm:$0x3] %vm323, %v713
    %s715 = scalar_lea.vmem [#allocation2], 12
    %v716 = vld [vmem:[%s715] sm:$0x3]
    %v718 = vsel %vm53, %v713, 0
    %720 = vmatprep.subr.mxu0 0.0
    %721 = vmatpush1.msra.mxu0 %v242
    %722 = vmatprep.subr.mxu0 0.0
    %723 = vmatpush1.msra.mxu0 %v243
    %724 = vmatprep.subr.mxu0 0.0
    %725 = vmatpush1.msra.mxu0 %v244
    %726 = vmatprep.subr.mxu0 0.0
    %727 = vmatpush1.msra.mxu0 %v245
    %728 = vmatprep.subr.mxu0 0.0
    %729 = vmatpush1.msra.mxu0 0.0
    %730 = vmatprep.subr.mxu0 0.0
    %731 = vmatpush1.msra.mxu0 0.0
    %732 = vmatprep.subr.mxu0 0.0
    %733 = vmatpush1.msra.mxu0 0.0
    %734 = vmatprep.subr.mxu0 0.0
    %735 = vmatpush1.msra.mxu0 0.0
    %736 = vmatprep.subr.mxu0 0.0
    %737 = vmatpush1.msra.mxu0 0.0
    %738 = vmatprep.subr.mxu0 0.0
    %739 = vmatpush1.msra.mxu0 0.0
    %740 = vmatprep.subr.mxu0 0.0
    %741 = vmatpush1.msra.mxu0 0.0
    %742 = vmatprep.subr.mxu0 0.0
    %743 = vmatpush1.msra.mxu0 0.0
    %744 = vmatprep.subr.mxu0 0.0
    %745 = vmatpush1.msra.mxu0 0.0
    %746 = vmatprep.subr.mxu0 0.0
    %747 = vmatpush1.msra.mxu0 0.0
    %748 = vmatprep.subr.mxu0 0.0
    %749 = vmatpush1.msra.mxu0 0.0
    %750 = vmatprep.subr.mxu0 0.0
    %751 = vmatpush1.msra.mxu0 0.0
    %752 = vmatprep.subr.mxu0 0.0
    %753 = vmatpush1.msra.mxu0 0.0
    %754 = vmatprep.subr.mxu0 0.0
    %755 = vmatpush1.msra.mxu0 0.0
    %756 = vmatprep.subr.mxu0 0.0
    %757 = vmatpush1.msra.mxu0 0.0
    %758 = vmatprep.subr.mxu0 0.0
    %759 = vmatpush1.msra.mxu0 0.0
    %760 = vmatprep.subr.mxu0 0.0
    %761 = vmatpush1.msra.mxu0 0.0
    %762 = vmatprep.subr.mxu0 0.0
    %763 = vmatpush1.msra.mxu0 0.0
    %764 = vmatprep.subr.mxu0 0.0
    %765 = vmatpush1.msra.mxu0 0.0
    %766 = vmatprep.subr.mxu0 0.0
    %767 = vmatpush1.msra.mxu0 0.0
    %768 = vmatprep.subr.mxu0 0.0
    %769 = vmatpush1.msra.mxu0 0.0
    %770 = vmatprep.subr.mxu0 0.0
    %771 = vmatpush1.msra.mxu0 0.0
    %772 = vmatprep.subr.mxu0 0.0
    %773 = vmatpush1.msra.mxu0 0.0
    %774 = vmatprep.subr.mxu0 0.0
    %775 = vmatpush1.msra.mxu0 0.0
    %776 = vmatprep.subr.mxu0 0.0
    %777 = vmatpush1.msra.mxu0 0.0
    %778 = vmatprep.subr.mxu0 0.0
    %779 = vmatpush1.msra.mxu0 0.0
    %780 = vmatprep.subr.mxu0 0.0
    %781 = vmatpush1.msra.mxu0 0.0
    %782 = vmatprep.subr.mxu0 0.0
    %783 = vmatpush1.msra.mxu0 0.0
    %784 = vmatprep.mubr.f32.mxu0 0.0
    %785 = vmatmul.mubr.f32.gmra.mrb[0].mxu0 %v718
    %v786 = vpop.f32.mrb[0].mxu0
    %v787 = vadd.f32 0.0, %v786
    %v788 = vpop.f32.mrb[0].mxu0
    %789 = vdwg.mxu0
    %v790 = vadd.f32 %v716, %v787
    %v791 = vtanh.pop %v790
    %792 = vst.msk [vmem:[%s715] sm:$0x3] %vm323, %v791
    %s793 = scalar_lea.vmem [#allocation2], 14
    %v794 = vld [vmem:[%s793] sm:$0x3]
    %v796 = vsel %vm53, %v791, 0
    %798 = vmatprep.subr.mxu0 0.0
    %799 = vmatpush1.msra.mxu0 %v242
    %800 = vmatprep.subr.mxu0 0.0
    %801 = vmatpush1.msra.mxu0 %v243
    %802 = vmatprep.subr.mxu0 0.0
    %803 = vmatpush1.msra.mxu0 %v244
    %804 = vmatprep.subr.mxu0 0.0
    %805 = vmatpush1.msra.mxu0 %v245
    %806 = vmatprep.subr.mxu0 0.0
    %807 = vmatpush1.msra.mxu0 0.0
    %808 = vmatprep.subr.mxu0 0.0
    %809 = vmatpush1.msra.mxu0 0.0
    %810 = vmatprep.subr.mxu0 0.0
    %811 = vmatpush1.msra.mxu0 0.0
    %812 = vmatprep.subr.mxu0 0.0
    %813 = vmatpush1.msra.mxu0 0.0
    %814 = vmatprep.subr.mxu0 0.0
    %815 = vmatpush1.msra.mxu0 0.0
    %816 = vmatprep.subr.mxu0 0.0
    %817 = vmatpush1.msra.mxu0 0.0
    %818 = vmatprep.subr.mxu0 0.0
    %819 = vmatpush1.msra.mxu0 0.0
    %820 = vmatprep.subr.mxu0 0.0
    %821 = vmatpush1.msra.mxu0 0.0
    %822 = vmatprep.subr.mxu0 0.0
    %823 = vmatpush1.msra.mxu0 0.0
    %824 = vmatprep.subr.mxu0 0.0
    %825 = vmatpush1.msra.mxu0 0.0
    %826 = vmatprep.subr.mxu0 0.0
    %827 = vmatpush1.msra.mxu0 0.0
    %828 = vmatprep.subr.mxu0 0.0
    %829 = vmatpush1.msra.mxu0 0.0
    %830 = vmatprep.subr.mxu0 0.0
    %831 = vmatpush1.msra.mxu0 0.0
    %832 = vmatprep.subr.mxu0 0.0
    %833 = vmatpush1.msra.mxu0 0.0
    %834 = vmatprep.subr.mxu0 0.0
    %835 = vmatpush1.msra.mxu0 0.0
    %836 = vmatprep.subr.mxu0 0.0
    %837 = vmatpush1.msra.mxu0 0.0
    %838 = vmatprep.subr.mxu0 0.0
    %839 = vmatpush1.msra.mxu0 0.0
    %840 = vmatprep.subr.mxu0 0.0
    %841 = vmatpush1.msra.mxu0 0.0
    %842 = vmatprep.subr.mxu0 0.0
    %843 = vmatpush1.msra.mxu0 0.0
    %844 = vmatprep.subr.mxu0 0.0
    %845 = vmatpush1.msra.mxu0 0.0
    %846 = vmatprep.subr.mxu0 0.0
    %847 = vmatpush1.msra.mxu0 0.0
    %848 = vmatprep.subr.mxu0 0.0
    %849 = vmatpush1.msra.mxu0 0.0
    %850 = vmatprep.subr.mxu0 0.0
    %851 = vmatpush1.msra.mxu0 0.0
    %852 = vmatprep.subr.mxu0 0.0
    %853 = vmatpush1.msra.mxu0 0.0
    %854 = vmatprep.subr.mxu0 0.0
    %855 = vmatpush1.msra.mxu0 0.0
    %856 = vmatprep.subr.mxu0 0.0
    %857 = vmatpush1.msra.mxu0 0.0
    %858 = vmatprep.subr.mxu0 0.0
    %859 = vmatpush1.msra.mxu0 0.0
    %860 = vmatprep.subr.mxu0 0.0
    %861 = vmatpush1.msra.mxu0 0.0
    %862 = vmatprep.mubr.f32.mxu0 0.0
    %863 = vmatmul.mubr.f32.gmra.mrb[0].mxu0 %v796
    %v864 = vpop.f32.mrb[0].mxu0
    %v865 = vadd.f32 0.0, %v864
    %v866 = vpop.f32.mrb[0].mxu0
    %867 = vdwg.mxu0
    %v868 = vadd.f32 %v794, %v865
    %v869 = vtanh.pop %v868
    %870 = vst.msk [vmem:[%s793] sm:$0x3] %vm323, %v869
    %871 = vst.msk [vmem:[#allocation7] sm:$0x3] %vm323, %v869
    %v872 = vld [vmem:[#allocation2] sm:$0xff]
    %v873 = vld [vmem:[#allocation2 + $0x8] sm:$0xff]
    %v874 = vld [vmem:[%s4] sm:$0xff]
    %v875 = vld [vmem:[%s4 + $0x8] sm:$0xff]
    %v876 = vld [vmem:[%s4 + $0x10] sm:$0xff]
    %v877 = vld [vmem:[%s4 + $0x18] sm:$0xff]
    %v878 = vld [vmem:[%s6] sm:$0x1]
    %v880 = vlaneseq
    %v881 = vshrl.u32 %v880, 7
    %v882 = vsub.s32 0, %v881
    %v883 = vrot.slane %v878, %v882
    %v886 = vsel %vm53, %v872, 0
    %v889 = vsel %vm53, %v873, 0
    %891 = vmatprep.subr.mxu0 0.0
    %892 = vmatpush1.msra.mxu0 %v874
    %893 = vmatprep.subr.mxu0 0.0
    %894 = vmatpush1.msra.mxu0 %v875
    %895 = vmatprep.subr.mxu0 0.0
    %896 = vmatpush1.msra.mxu0 %v876
    %897 = vmatprep.subr.mxu0 0.0
    %898 = vmatpush1.msra.mxu0 %v877
    %899 = vmatprep.subr.mxu0 0.0
    %900 = vmatpush1.msra.mxu0 0.0
    %901 = vmatprep.subr.mxu0 0.0
    %902 = vmatpush1.msra.mxu0 0.0
    %903 = vmatprep.subr.mxu0 0.0
    %904 = vmatpush1.msra.mxu0 0.0
    %905 = vmatprep.subr.mxu0 0.0
    %906 = vmatpush1.msra.mxu0 0.0
    %907 = vmatprep.subr.mxu0 0.0
    %908 = vmatpush1.msra.mxu0 0.0
    %909 = vmatprep.subr.mxu0 0.0
    %910 = vmatpush1.msra.mxu0 0.0
    %911 = vmatprep.subr.mxu0 0.0
    %912 = vmatpush1.msra.mxu0 0.0
    %913 = vmatprep.subr.mxu0 0.0
    %914 = vmatpush1.msra.mxu0 0.0
    %915 = vmatprep.subr.mxu0 0.0
    %916 = vmatpush1.msra.mxu0 0.0
    %917 = vmatprep.subr.mxu0 0.0
    %918 = vmatpush1.msra.mxu0 0.0
    %919 = vmatprep.subr.mxu0 0.0
    %920 = vmatpush1.msra.mxu0 0.0
    %921 = vmatprep.subr.mxu0 0.0
    %922 = vmatpush1.msra.mxu0 0.0
    %923 = vmatprep.subr.mxu0 0.0
    %924 = vmatpush1.msra.mxu0 0.0
    %925 = vmatprep.subr.mxu0 0.0
    %926 = vmatpush1.msra.mxu0 0.0
    %927 = vmatprep.subr.mxu0 0.0
    %928 = vmatpush1.msra.mxu0 0.0
    %929 = vmatprep.subr.mxu0 0.0
    %930 = vmatpush1.msra.mxu0 0.0
    %931 = vmatprep.subr.mxu0 0.0
    %932 = vmatpush1.msra.mxu0 0.0
    %933 = vmatprep.subr.mxu0 0.0
    %934 = vmatpush1.msra.mxu0 0.0
    %935 = vmatprep.subr.mxu0 0.0
    %936 = vmatpush1.msra.mxu0 0.0
    %937 = vmatprep.subr.mxu0 0.0
    %938 = vmatpush1.msra.mxu0 0.0
    %939 = vmatprep.subr.mxu0 0.0
    %940 = vmatpush1.msra.mxu0 0.0
    %941 = vmatprep.subr.mxu0 0.0
    %942 = vmatpush1.msra.mxu0 0.0
    %943 = vmatprep.subr.mxu0 0.0
    %944 = vmatpush1.msra.mxu0 0.0
    %945 = vmatprep.subr.mxu0 0.0
    %946 = vmatpush1.msra.mxu0 0.0
    %947 = vmatprep.subr.mxu0 0.0
    %948 = vmatpush1.msra.mxu0 0.0
    %949 = vmatprep.subr.mxu0 0.0
    %950 = vmatpush1.msra.mxu0 0.0
    %951 = vmatprep.subr.mxu0 0.0
    %952 = vmatpush1.msra.mxu0 0.0
    %953 = vmatprep.subr.mxu0 0.0
    %954 = vmatpush1.msra.mxu0 0.0
    %955 = vmatprep.mubr.f32.mxu0 0.0
    %956 = vmatmul.mubr.f32.gmra.mrb[0].mxu0 %v886
    %v957 = vpop.f32.mrb[0].mxu0
    %v958 = vadd.f32 %v883, %v957
    %v959 = vpop.f32.mrb[0].mxu0
    %960 = vmatprep.mubr.f32.mxu0 0.0
    %961 = vmatmul.mubr.f32.gmra.mrb[0].mxu0 %v889
    %v962 = vpop.f32.mrb[0].mxu0
    %v963 = vadd.f32 %v883, %v962
    %v964 = vpop.f32.mrb[0].mxu0
    %965 = vdwg.mxu0
    %966 = vst.msk [vmem:[#allocation6] sm:$0xff] %vm158, %v958
    %967 = vst.msk [vmem:[#allocation6 + $0x8] sm:$0xff] %vm158, %v963
    // Predicated region
    $region38: #{tpu_custom_call.1} parent=1 // pred_check
      _
    $region39: #{tpu_custom_call.1} parent=1 // pred_check_branch
      %969 = sbr.rel (0) target = $region41
    $region40: #{tpu_custom_call.1} parent=1 // pred_region
      %s971 = ssub.s32 256, 256
      %972 = vsyncadd [#allocation5], %s971
      %s973 = sshll.u32 [#allocation6], 4
      %s974 = int_to_ptr.vmem [resolvable:$true] %s973
      %979 = dma.vmem_to_hbm [thread:$0]  %s974, 256, %s8, [#allocation5], 128, 128, 8
    $region41: #{tpu_custom_call.1} parent=1 // pred_fallthru
      _
    // Predicated region
    $region42: #{tpu_custom_call.1} parent=1 // pred_check
      _
    $region43: #{tpu_custom_call.1} parent=1 // pred_check_branch
      %981 = sbr.rel (0) target = $region45
    $region44: #{tpu_custom_call.1} parent=1 // pred_region
      %s983 = ssub.s32 32, 32
      %984 = vsyncadd [#allocation8], %s983
      %s986 = sshll.u32 [#allocation7], 4
      %s987 = int_to_ptr.vmem [resolvable:$true] %s986
      %989 = dma.vmem_to_hbm [thread:$0]  %s987, 32, %s9, [#allocation8]
    $region45: #{tpu_custom_call.1} parent=1 // pred_fallthru
      _
    // Predicated region
    $region46: #{tpu_custom_call.1} parent=1 // pred_check
      _
    $region47: #{tpu_custom_call.1} parent=1 // pred_check_branch
      %991 = sbr.rel (0) target = $region49
    $region48: #{tpu_custom_call.1} parent=1 // pred_region
      %992 = dma.done [#allocation5], 256
    $region49: #{tpu_custom_call.1} parent=1 // pred_fallthru
      _
    // Predicated region
    $region50: #{tpu_custom_call.1} parent=1 // pred_check
      _
    $region51: #{tpu_custom_call.1} parent=1 // pred_check_branch
      %994 = sbr.rel (0) target = $region53
    $region52: #{tpu_custom_call.1} parent=1 // pred_region
      %995 = dma.done [#allocation8], 32
    $region53: #{tpu_custom_call.1} parent=1 // pred_fallthru
      _
    %996 = vsyncpa [#allocation4], 1
    %997 = vsyncpa [#allocation5], 1
    %998 = vsyncpa [#allocation8], 1

</llo_original>
